<compile_context>
chip_gen: v7x
topology: tpu7x:2x2x1
jax: 0.10.0
libtpu: 0.0.40
codegen_flags: <defaults>
</compile_context>

<pallas_src>
from functools import partial

import numpy as np
import jax
import jax.numpy as jnp
from jax import lax
from jax.experimental import pallas as pl
from jax.experimental.pallas import tpu as pltpu


def _choose_pack(rows: int, width: int) -> int:
    """Pack k logical rows per vreg row so k*width is a multiple of 128."""
    if width >= 128:
        return 1
    best = 1
    max_k = max(1, 512 // width)
    for k in range(1, max_k + 1):
        if rows % k == 0 and (k * width) % 128 == 0:
            best = k
    return best


def _choose_row_tile(rows_packed: int, width_packed: int,
                     itemsize: int = 4, target_bytes: int = 4 << 20) -> int:
    """Largest row tile (multiple of 8, ~target_bytes) that fits the array."""
    if rows_packed <= 8:
        return rows_packed
    t = target_bytes // (width_packed * itemsize)
    t = max(8, (t // 8) * 8)
    if t >= rows_packed:
        return rows_packed
    return t


def _make_kernel(delta_t: float, degree: int, edge_order: int,
                 logical_w: int, packed_w: int):
    h = float(delta_t)
    W = int(logical_w)       # logical gradient length
    Wp = int(packed_w)       # packed lane width (k * W)

    def kernel(x_ref, o_ref):
        x = x_ref[...].astype(jnp.float32)

        # Hoisted once (not rebuilt per gradient pass): lane index & edge masks.
        idx = lax.broadcasted_iota(jnp.int32, x.shape, dimension=1)
        idx_mod = idx % W
        first_mask = idx_mod == 0
        last_mask = idx_mod == (W - 1)

        def _grad_last(v):
            # Stencil taps via XLU rolls.  Wrap-around values (and values that
            # cross a packed-row boundary) only ever land on positions that are
            # overwritten by the edge formulas below.
            v_plus = pltpu.roll(v, shift=(Wp - 1) % Wp, axis=1)    # v[i+1]
            v_minus = pltpu.roll(v, shift=1, axis=1)               # v[i-1]
            central = (v_plus - v_minus) * (0.5 / h)

            if edge_order == 1:
                first = (v_plus - v) * (1.0 / h)
                last = (v - v_minus) * (1.0 / h)
            else:  # edge_order == 2
                v_plus2 = pltpu.roll(v, shift=(Wp - 2) % Wp, axis=1)   # v[i+2]
                v_minus2 = pltpu.roll(v, shift=2, axis=1)              # v[i-2]
                first = (-3.0 * v + 4.0 * v_plus - v_plus2) * (0.5 / h)
                last = (3.0 * v - 4.0 * v_minus + v_minus2) * (0.5 / h)

            g = jnp.where(first_mask, first, central)
            g = jnp.where(last_mask, last, g)
            return g

        out = x
        if degree <= 8:
            for _ in range(degree):
                x = _grad_last(x)
                out = out + x
        else:
            def body(_, carry):
                xc, oc = carry
                g = _grad_last(xc)
                return g, oc + g
            x, out = lax.fori_loop(0, degree, body, (x, out))

        o_ref[...] = out.astype(o_ref.dtype)

    return kernel


@partial(jax.jit, static_argnames=("delta_t", "degree", "edge_order"))
def dn_positional_encoding(x, *, delta_t: float, degree: int = 1,
                           edge_order: int = 1):
    """x: (B, C, H, W) array (NCHW). Gradient is taken along the last dim."""
    B, C, H, W = x.shape
    if edge_order == 1:
        assert W >= 2, "edge_order=1 requires W >= 2"
    else:
        assert edge_order == 2 and W >= 3, "edge_order=2 requires W >= 3"

    rows = B * C * H

    # Lane packing: k logical rows per vreg row (contiguous reshape, free).
    k = _choose_pack(rows, W)
    rows_packed = rows // k
    width_packed = k * W
    x2d = x.reshape(rows_packed, width_packed)

    row_tile = _choose_row_tile(rows_packed, width_packed,
                                itemsize=jnp.dtype(x.dtype).itemsize)
    grid = (pl.cdiv(rows_packed, row_tile),)

    kernel = _make_kernel(delta_t, degree, edge_order, W, width_packed)

    out2d = pl.pallas_call(
        kernel,
        out_shape=jax.ShapeDtypeStruct((rows_packed, width_packed), x.dtype),
        grid_spec=pltpu.PrefetchScalarGridSpec(
            num_scalar_prefetch=0,
            grid=grid,
            in_specs=[pl.BlockSpec((row_tile, width_packed), lambda i: (i, 0))],
            out_specs=pl.BlockSpec((row_tile, width_packed), lambda i: (i, 0)),
        ),
        input_output_aliases={0: 0},
        compiler_params=pltpu.CompilerParams(
            dimension_semantics=("parallel",),
            vmem_limit_bytes=32 * 1024 * 1024,
        ),
    )(x2d)

    return out2d.reshape(B, C, H, W)


def _numpy_reference(x, delta_t, degree, edge_order):
    x = np.asarray(x, dtype=np.float64)
    out = x.copy()
    for _ in range(degree):
        x = np.gradient(x, delta_t, axis=-1, edge_order=edge_order)
        out = out + x
    return out


if __name__ == "__main__":
    key = jax.random.PRNGKey(0)
    B, C, H, W = 2, 4, 16, 16
    x = jax.random.normal(key, (B, C, H, W), dtype=jnp.float32)

    delta_t = 0.5   # timedelta(milliseconds=500).total_seconds()
    degree = 2
    edge_order = 1

    out = dn_positional_encoding(x, delta_t=delta_t, degree=degree,
                                 edge_order=edge_order)
    out = jax.block_until_ready(out)

    ref = _numpy_reference(np.asarray(x), delta_t, degree, edge_order)
    np.testing.assert_allclose(np.asarray(out), ref, rtol=1e-4, atol=1e-4)

    # Also exercise edge_order=2 to cover the second stencil path.
    out2 = dn_positional_encoding(x, delta_t=delta_t, degree=1, edge_order=2)
    out2 = jax.block_until_ready(out2)
    ref2 = _numpy_reference(np.asarray(x), delta_t, 1, 2)
    np.testing.assert_allclose(np.asarray(out2), ref2, rtol=1e-4, atol=1e-4)

    print("KERNEL_OK")
</pallas_src>

<mosaic_0001>
module attributes {stable_mosaic.version = 11 : i64} {
  func.func @kernel(%arg0: i32, %arg1: memref<4x512xf32, #tpu.memory_space<vmem>>, %arg2: memref<4x512xf32, #tpu.memory_space<vmem>>) attributes {dimension_semantics = [#tpu.dimension_semantics<parallel>], iteration_bounds = array<i64: 1>, scalar_prefetch = 0 : i64, scratch_operands = 0 : i64, tpu.core_type = #tpu.core_type<tc>, window_params = [{transform_indices = @transform_0, window_bounds = array<i64: 4, 512>}, {transform_indices = @transform_1, window_bounds = array<i64: 4, 512>}]} {
    %c0 = arith.constant 0 : index
    %c0_0 = arith.constant 0 : index
    %0 = vector.load %arg1[%c0, %c0_0] : memref<4x512xf32, #tpu.memory_space<vmem>>, vector<4x512xf32>
    %1 = tpu.iota {dimensions = array<i32: 1>} : vector<4x512xi32>
    %c16_i32 = arith.constant 16 : i32
    %c0_i32 = arith.constant 0 : i32
    %2 = arith.cmpi eq, %c16_i32, %c0_i32 : i32
    %c1_i32 = arith.constant 1 : i32
    %3 = arith.select %2, %c1_i32, %c16_i32 : i32
    %4 = vector.broadcast %3 : i32 to vector<4x512xi32>
    %5 = arith.remsi %1, %4 : vector<4x512xi32>
    %c0_i32_1 = arith.constant 0 : i32
    %6 = vector.broadcast %c0_i32_1 : i32 to vector<4x512xi32>
    %7 = arith.cmpi ne, %5, %6 : vector<4x512xi32>
    %c0_i32_2 = arith.constant 0 : i32
    %8 = vector.broadcast %c0_i32_2 : i32 to vector<4x512xi32>
    %9 = arith.cmpi slt, %5, %8 : vector<4x512xi32>
    %c0_i32_3 = arith.constant 0 : i32
    %10 = arith.cmpi slt, %3, %c0_i32_3 : i32
    %11 = vector.broadcast %10 : i1 to vector<4x512xi1>
    %12 = vector.broadcast %11 : vector<4x512xi1> to vector<4x512xi1>
    %13 = arith.xori %9, %12 : vector<4x512xi1>
    %14 = arith.andi %13, %7 : vector<4x512xi1>
    %15 = vector.broadcast %3 : i32 to vector<4x512xi32>
    %16 = arith.addi %5, %15 : vector<4x512xi32>
    %17 = arith.select %14, %16, %5 : vector<4x512xi1>, vector<4x512xi32>
    %c0_i32_4 = arith.constant 0 : i32
    %18 = vector.broadcast %c0_i32_4 : i32 to vector<4x512xi32>
    %19 = arith.cmpi eq, %17, %18 : vector<4x512xi32>
    %c15_i32 = arith.constant 15 : i32
    %20 = vector.broadcast %c15_i32 : i32 to vector<4x512xi32>
    %21 = arith.cmpi eq, %17, %20 : vector<4x512xi32>
    %c511_i32 = arith.constant 511 : i32
    %22 = tpu.dynamic_rotate %0 by %c511_i32 dim 1 : vector<4x512xf32>, i32 -> vector<4x512xf32>
    %c1_i32_5 = arith.constant 1 : i32
    %23 = tpu.dynamic_rotate %0 by %c1_i32_5 dim 1 : vector<4x512xf32>, i32 -> vector<4x512xf32>
    %24 = arith.subf %22, %23 : vector<4x512xf32>
    %cst = arith.constant 1.000000e+00 : f32
    %25 = vector.broadcast %cst : f32 to vector<4x512xf32>
    %26 = arith.mulf %24, %25 : vector<4x512xf32>
    %27 = arith.subf %22, %0 : vector<4x512xf32>
    %cst_6 = arith.constant 2.000000e+00 : f32
    %28 = vector.broadcast %cst_6 : f32 to vector<4x512xf32>
    %29 = arith.mulf %27, %28 : vector<4x512xf32>
    %30 = arith.subf %0, %23 : vector<4x512xf32>
    %cst_7 = arith.constant 2.000000e+00 : f32
    %31 = vector.broadcast %cst_7 : f32 to vector<4x512xf32>
    %32 = arith.mulf %30, %31 : vector<4x512xf32>
    %33 = arith.select %19, %29, %26 : vector<4x512xi1>, vector<4x512xf32>
    %34 = arith.select %21, %32, %33 : vector<4x512xi1>, vector<4x512xf32>
    %35 = arith.addf %0, %34 : vector<4x512xf32>
    %c511_i32_8 = arith.constant 511 : i32
    %36 = tpu.dynamic_rotate %34 by %c511_i32_8 dim 1 : vector<4x512xf32>, i32 -> vector<4x512xf32>
    %c1_i32_9 = arith.constant 1 : i32
    %37 = tpu.dynamic_rotate %34 by %c1_i32_9 dim 1 : vector<4x512xf32>, i32 -> vector<4x512xf32>
    %38 = arith.subf %36, %37 : vector<4x512xf32>
    %cst_10 = arith.constant 1.000000e+00 : f32
    %39 = vector.broadcast %cst_10 : f32 to vector<4x512xf32>
    %40 = arith.mulf %38, %39 : vector<4x512xf32>
    %41 = arith.subf %36, %34 : vector<4x512xf32>
    %cst_11 = arith.constant 2.000000e+00 : f32
    %42 = vector.broadcast %cst_11 : f32 to vector<4x512xf32>
    %43 = arith.mulf %41, %42 : vector<4x512xf32>
    %44 = arith.subf %34, %37 : vector<4x512xf32>
    %cst_12 = arith.constant 2.000000e+00 : f32
    %45 = vector.broadcast %cst_12 : f32 to vector<4x512xf32>
    %46 = arith.mulf %44, %45 : vector<4x512xf32>
    %47 = arith.select %19, %43, %40 : vector<4x512xi1>, vector<4x512xf32>
    %48 = arith.select %21, %46, %47 : vector<4x512xi1>, vector<4x512xf32>
    %49 = arith.addf %35, %48 : vector<4x512xf32>
    %c0_13 = arith.constant 0 : index
    %c0_14 = arith.constant 0 : index
    %50 = vector.load %arg2[%c0_13, %c0_14] : memref<4x512xf32, #tpu.memory_space<vmem>>, vector<4x512xf32>
    tpu.vector_store %arg2[%c0_13, %c0_14], %49 {strides = array<i32>} : memref<4x512xf32, #tpu.memory_space<vmem>>, vector<4x512xf32>,
    return
  }
  func.func @transform_0(%arg0: i32) -> (i32, i32) {
    %c0_i32 = arith.constant 0 : i32
    %c0_i32_0 = arith.constant 0 : i32
    return %arg0, %c0_i32 : i32, i32
  }
  func.func @transform_1(%arg0: i32) -> (i32, i32) {
    %c0_i32 = arith.constant 0 : i32
    %c0_i32_0 = arith.constant 0 : i32
    return %arg0, %c0_i32 : i32, i32
  }
}

</mosaic_0001>

<llo_original>
// kernel: dn_positional_encoding.1
$region0: #{dn_positional_encoding.1}
  #allocation0 [shape = 'u32[]', space=smem, size = 0x4, offset = 0x4, fixed_abs, tag = 'smem constant byte address 0x4 - core index']
  #allocation1 [shape = 'u32[144,128]{1,0:T(1,128)}', space=vmem, size = 0x12000, scoped, tag = 'internal scratch']
  %s0 = inlined_call_operand.vmem [shape: f32[4,512], index: 0, kind: input, shape index: {}, may-alias: {0,1}]
  %s1 = inlined_call_operand.vmem [shape: f32[4,512], index: 1, kind: output, shape index: {}, may-alias: {0,1}]
  %s2 = sld [smem:[#allocation0]]
  $region14: #{dn_positional_encoding.1} parent=0
    _
  %s4 = ssub.s32 1, %s2
  %s5 = scalar_select 0, %s4, %s2
  // Predicated region
  $region2: #{dn_positional_encoding.1} parent=0 // pred_check
    _
  $region3: #{dn_positional_encoding.1} parent=0 // pred_check_branch
    %7 = sbr.rel (0) target = $region5
  $region4: #{dn_positional_encoding.1} parent=0 // pred_region
    _
  $region5: #{dn_positional_encoding.1} parent=0 // pred_fallthru
    _
  %v8 = vld [vmem:[%s0] sm:$0xff]
  %v9 = vld [vmem:[%s0 + $0x8] sm:$0xff]
  %v10 = vlaneseq
  %v11 = vand.u32 %v10, 127
  %v12 = vadd.s32 %v11, 128
  %v13 = vadd.s32 %v11, 256
  %v14 = vadd.s32 %v11, 384
  %vm15 = vcmp.lt.s32.totalorder %v11, 0
  %v16 = vsub.s32 0, %v11
  %v17 = vsel %vm15, %v16, %v11
  %v18 = vshrl.u32 %v17, 4
  %v19 = vand.u32 %v17, 15
  %v20 = vsub.s32 0, %v19
  %v21 = vsel %vm15, %v20, %v19
  %vm22 = vcmp.lt.s32.totalorder %v12, 0
  %v23 = vsub.s32 0, %v12
  %v24 = vsel %vm22, %v23, %v12
  %v25 = vshrl.u32 %v24, 4
  %v26 = vand.u32 %v24, 15
  %v27 = vsub.s32 0, %v26
  %v28 = vsel %vm22, %v27, %v26
  %vm29 = vcmp.lt.s32.totalorder %v13, 0
  %v30 = vsub.s32 0, %v13
  %v31 = vsel %vm29, %v30, %v13
  %v32 = vshrl.u32 %v31, 4
  %v33 = vand.u32 %v31, 15
  %v34 = vsub.s32 0, %v33
  %v35 = vsel %vm29, %v34, %v33
  %vm36 = vcmp.lt.s32.totalorder %v14, 0
  %v37 = vsub.s32 0, %v14
  %v38 = vsel %vm36, %v37, %v14
  %v39 = vshrl.u32 %v38, 4
  %v40 = vand.u32 %v38, 15
  %v41 = vsub.s32 0, %v40
  %v42 = vsel %vm36, %v41, %v40
  %vm43 = vcmp.ne.s32.totalorder %v21, 0
  %vm44 = vcmp.ne.s32.totalorder %v28, 0
  %vm45 = vcmp.ne.s32.totalorder %v35, 0
  %vm46 = vcmp.ne.s32.totalorder %v42, 0
  %vm47 = vcmp.lt.s32.totalorder %v21, 0
  %vm48 = vcmp.lt.s32.totalorder %v28, 0
  %vm49 = vcmp.lt.s32.totalorder %v35, 0
  %vm50 = vcmp.lt.s32.totalorder %v42, 0
  %vm51 = vmand %vm47, %vm43
  %vm52 = vmand %vm48, %vm44
  %vm53 = vmand %vm49, %vm45
  %vm54 = vmand %vm50, %vm46
  %v55 = vadd.s32 %v21, 16
  %v56 = vadd.s32 %v28, 16
  %v57 = vadd.s32 %v35, 16
  %v58 = vadd.s32 %v42, 16
  %v59 = vsel %vm51, %v55, %v21
  %v60 = vsel %vm52, %v56, %v28
  %v61 = vsel %vm53, %v57, %v35
  %v62 = vsel %vm54, %v58, %v42
  %vm63 = vcmp.eq.s32.totalorder %v59, 0
  %vm64 = vcmp.eq.s32.totalorder %v60, 0
  %vm65 = vcmp.eq.s32.totalorder %v61, 0
  %vm66 = vcmp.eq.s32.totalorder %v62, 0
  %vm67 = vcmp.eq.s32.totalorder %v59, 15
  %vm68 = vcmp.eq.s32.totalorder %v60, 15
  %vm69 = vcmp.eq.s32.totalorder %v61, 15
  %vm70 = vcmp.eq.s32.totalorder %v62, 15
  %v73 = vcombine.high %v8, %v8
  %v74 = vcombine.high %v9, %v9
  %77 = vrot.lane.b32.xlu0 %v8, 127
  %v78 = vpop.permute.xlu0 %77
  %79 = vrot.lane.b32.xlu0 %v73, 127
  %v80 = vpop.permute.xlu0 %79
  %81 = vrot.lane.b32.xlu0 %v9, 127
  %v82 = vpop.permute.xlu0 %81
  %83 = vrot.lane.b32.xlu0 %v74, 127
  %v84 = vpop.permute.xlu0 %83
  %vm85 = vcmp.lt.s32.totalorder %v11, 127
  %v86 = vsel %vm85, %v82, %v84
  %v87 = vsel %vm85, %v80, %v82
  %v88 = vsel %vm85, %v78, %v80
  %v89 = vsel %vm85, %v84, %v78
  %90 = vrot.lane.b32.xlu0 %v8, 1
  %v91 = vpop.permute.xlu0 %90
  %92 = vrot.lane.b32.xlu0 %v73, 1
  %v93 = vpop.permute.xlu0 %92
  %94 = vrot.lane.b32.xlu0 %v9, 1
  %v95 = vpop.permute.xlu0 %94
  %96 = vrot.lane.b32.xlu0 %v74, 1
  %v97 = vpop.permute.xlu0 %96
  %vm98 = vcmp.lt.s32.totalorder %v11, 1
  %v99 = vsel %vm98, %v95, %v97
  %v100 = vsel %vm98, %v93, %v95
  %v101 = vsel %vm98, %v91, %v93
  %v102 = vsel %vm98, %v97, %v91
  %v103 = vsub.f32 %v88, %v102
  %v104 = vsub.f32 %v87, %v101
  %v105 = vsub.f32 %v86, %v100
  %v106 = vsub.f32 %v89, %v99
  %v107 = vsub.f32 %v88, %v8
  %v108 = vsub.f32 %v87, %v73
  %v109 = vsub.f32 %v86, %v9
  %v110 = vsub.f32 %v89, %v74
  %v111 = vmul.f32 %v107, 2.0
  %v112 = vmul.f32 %v108, 2.0
  %v113 = vmul.f32 %v109, 2.0
  %v114 = vmul.f32 %v110, 2.0
  %v119 = vcombine.low %v102, %v101
  %v120 = vcombine.low %v100, %v99
  %v123 = vsub.f32 %v8, %v119
  %v124 = vsub.f32 %v9, %v120
  %v125 = vmul.f32 %v123, 2.0
  %v126 = vmul.f32 %v124, 2.0
  %v127 = vsel %vm63, %v111, %v103
  %v128 = vsel %vm64, %v112, %v104
  %v129 = vsel %vm65, %v113, %v105
  %v130 = vsel %vm66, %v114, %v106
  %v133 = vcombine.high %v125, %v125
  %v134 = vcombine.high %v126, %v126
  %v137 = vsel %vm67, %v125, %v127
  %v138 = vsel %vm68, %v133, %v128
  %v139 = vsel %vm69, %v126, %v129
  %v140 = vsel %vm70, %v134, %v130
  %v145 = vcombine.low %v137, %v138
  %v146 = vcombine.low %v139, %v140
  %v149 = vadd.f32 %v8, %v145
  %v150 = vadd.f32 %v9, %v146
  %151 = vrot.lane.b32.xlu0 %v137, 127
  %v152 = vpop.permute.xlu0 %151
  %153 = vrot.lane.b32.xlu0 %v138, 127
  %v154 = vpop.permute.xlu0 %153
  %155 = vrot.lane.b32.xlu0 %v139, 127
  %v156 = vpop.permute.xlu0 %155
  %157 = vrot.lane.b32.xlu0 %v140, 127
  %v158 = vpop.permute.xlu0 %157
  %v159 = vsel %vm85, %v156, %v158
  %v160 = vsel %vm85, %v154, %v156
  %v161 = vsel %vm85, %v152, %v154
  %v162 = vsel %vm85, %v158, %v152
  %163 = vrot.lane.b32.xlu0 %v137, 1
  %v164 = vpop.permute.xlu0 %163
  %165 = vrot.lane.b32.xlu0 %v138, 1
  %v166 = vpop.permute.xlu0 %165
  %167 = vrot.lane.b32.xlu0 %v139, 1
  %v168 = vpop.permute.xlu0 %167
  %169 = vrot.lane.b32.xlu0 %v140, 1
  %v170 = vpop.permute.xlu0 %169
  %v171 = vsel %vm98, %v168, %v170
  %v172 = vsel %vm98, %v166, %v168
  %v173 = vsel %vm98, %v164, %v166
  %v174 = vsel %vm98, %v170, %v164
  %v175 = vsub.f32 %v161, %v174
  %v176 = vsub.f32 %v160, %v173
  %v177 = vsub.f32 %v159, %v172
  %v178 = vsub.f32 %v162, %v171
  %v179 = vsub.f32 %v161, %v137
  %v180 = vsub.f32 %v160, %v138
  %v181 = vsub.f32 %v159, %v139
  %v182 = vsub.f32 %v162, %v140
  %v183 = vmul.f32 %v179, 2.0
  %v184 = vmul.f32 %v180, 2.0
  %v185 = vmul.f32 %v181, 2.0
  %v186 = vmul.f32 %v182, 2.0
  %v187 = vsub.f32 %v137, %v174
  %v188 = vsub.f32 %v138, %v173
  %v189 = vsub.f32 %v139, %v172
  %v190 = vsub.f32 %v140, %v171
  %v191 = vmul.f32 %v187, 2.0
  %v192 = vmul.f32 %v188, 2.0
  %v193 = vmul.f32 %v189, 2.0
  %v194 = vmul.f32 %v190, 2.0
  %v195 = vsel %vm63, %v183, %v175
  %v196 = vsel %vm64, %v184, %v176
  %v197 = vsel %vm65, %v185, %v177
  %v198 = vsel %vm66, %v186, %v178
  %v199 = vsel %vm67, %v191, %v195
  %v200 = vsel %vm68, %v192, %v196
  %v201 = vsel %vm69, %v193, %v197
  %v202 = vsel %vm70, %v194, %v198
  %v207 = vcombine.low %v199, %v200
  %v208 = vcombine.low %v201, %v202
  %v211 = vadd.f32 %v149, %v207
  %v212 = vadd.f32 %v150, %v208
  %213 = vst [vmem:[%s1] sm:$0xff] %v211
  %214 = vst [vmem:[%s1 + $0x8] sm:$0xff] %v212
  // Predicated region
  $region6: #{dn_positional_encoding.1} parent=0 // pred_check
    _
  $region7: #{dn_positional_encoding.1} parent=0 // pred_check_branch
    %216 = sbr.rel (0) target = $region9
  $region8: #{dn_positional_encoding.1} parent=0 // pred_region
    _
  $region9: #{dn_positional_encoding.1} parent=0 // pred_fallthru
    _
  // Predicated region
  $region10: #{dn_positional_encoding.1} parent=0 // pred_check
    _
  $region11: #{dn_positional_encoding.1} parent=0 // pred_check_branch
    %218 = sbr.rel (0) target = $region13
  $region12: #{dn_positional_encoding.1} parent=0 // pred_region
    _
  $region13: #{dn_positional_encoding.1} parent=0 // pred_fallthru
    _

</llo_original>
